<compile_context>
chip_gen: v5e
topology: v5e:2x2
jax: 0.10.0
libtpu: 0.0.40
codegen_flags: <defaults>
</compile_context>

<pallas_src>
import functools

import jax
import jax.numpy as jnp
from jax.experimental import pallas as pl
from jax.experimental.pallas import tpu as pltpu


def _round_up(x, m):
    return ((x + m - 1) // m) * m


def _plan_tiles(n, d_pad, k_pad, mm_bytes, fold_esq, vmem_cap):
    """Pick the token tile, latents buffer depth, and VMEM budget per generation."""
    budget = max((vmem_cap * 3) // 4, 24 << 20)          # v7x: ~48 MiB, v5e/v6e: ~96 MiB
    x_bufs = 3 if vmem_cap >= (96 << 20) else 2          # deeper x pipeline on v5e/v6e
    resident = k_pad * d_pad * mm_bytes                  # codebook (pl.Buffered(1))
    if not fold_esq:
        resident += k_pad * 512                          # (k_pad, 1) f32, lane-padded

    tn = None
    for cand in (4096, 2048, 1024, 512, 256, 128):
        per_step = (x_bufs * cand * d_pad * mm_bytes     # latents tiles
                    + 3 * k_pad * cand * 4               # dist' + argmin/select temps
                    + 256 * cand)                        # (1, tn) rows, double-buffered
        if resident + per_step <= budget:
            tn = cand
            break
    if tn is None:
        # TODO(synk): K-streaming path (running min/argmin/d_tgt carry over an
        # "arbitrary" K grid axis) for codebooks too large for the resident path.
        raise NotImplementedError(
            "codebook too large for the resident-VMEM path: "
            f"K_pad={k_pad}, D_pad={d_pad}, VMEM={vmem_cap >> 20} MiB")

    # Guarantee >= 2 token tiles whenever N allows it, so the "parallel" grid
    # axis can actually feed both of v7x's TensorCores.
    tn = min(tn, max(128, _round_up(-(-n // 2), 128)))
    return tn, x_bufs, budget


def _vq_kernel(*refs, fold_esq, has_target, inv_d):
    """One token tile: dist' = ||e||^2 - 2<e,x> -> argmin (+ target-row loss)."""
    if has_target:
        if fold_esq:
            x_ref, e_ref, xsq_ref, tgt_ref, inds_ref, loss_ref = refs
            esq_ref = None
        else:
            x_ref, e_ref, esq_ref, xsq_ref, tgt_ref, inds_ref, loss_ref = refs
    else:
        if fold_esq:
            x_ref, e_ref, inds_ref = refs
            esq_ref = None
        else:
            x_ref, e_ref, esq_ref, inds_ref = refs

    # dist'[k, n] = ||e_k||^2 - 2 <e_k, x_n>  -- the true squared distance minus
    # the per-token ||x_n||^2 (a per-column shift that cannot change the argmin).
    # e_ref already holds -2*e (and, when fold_esq, ||e||^2 in a padded column
    # matched by a 1.0 column in x), so the MXU emits dist' directly.
    dist = jax.lax.dot_general(
        e_ref[...], x_ref[...],
        dimension_numbers=(((1,), (1,)), ((), ())),
        preferred_element_type=jnp.float32)                      # (k_pad, tn)
    if esq_ref is not None:
        dist = dist + esq_ref[...]                               # (k_pad, 1) broadcast

    k_pad = dist.shape[0]
    k_iota = jax.lax.broadcasted_iota(jnp.int32, (k_pad, 1), 0)  # column, not KxTN

    # First-minimal-index argmin over the codebook (sublane) axis.
    # TODO(synk): try a fused (value,index) reduce / jnp.argmin and confirm in the
    # bundle dump that it removes a VPU/XLU pass vs this two-pass formulation.
    dmin = jnp.min(dist, axis=0, keepdims=True)                  # (1, tn)
    inds_ref[...] = jnp.min(jnp.where(dist == dmin, k_iota, k_pad),
                            axis=0, keepdims=True).astype(jnp.int32)

    if has_target:
        # commitment loss per token = ||x_n - e_{tgt[n]}||^2 / D
        #                          = (dist'[tgt[n], n] + ||x_n||^2) / D
        d_tgt = jnp.sum(jnp.where(k_iota == tgt_ref[...], dist, 0.0),
                        axis=0, keepdims=True)                   # (1, tn)
        # clamp >= 0: expanded-squares form can cancel slightly negative.
        loss_ref[...] = jnp.maximum(d_tgt + xsq_ref[...], 0.0) * inv_d


def vector_quantizer_forward(target, latents, embedding_weight, *,
                             matmul_dtype=jnp.bfloat16):
    """Mirrors VectorQuantizer.forward(target, latents).

    target: (B*T,) int indices or None
    latents: (B, T, D) float
    embedding_weight: (K, D) float
    Returns (commitment_loss (B, T), encoding_inds (1, B*T)), or just
    encoding_inds (1, B*T) when target is None.

    matmul_dtype=bfloat16 (default) uses the native MXU path with f32
    accumulation; argmin may flip on near-tied codes.  Use float32 when
    bit-stable indices are required (e.g. reproducible training).
    """
    B, T, D = latents.shape
    K, Dk = embedding_weight.shape
    assert D == Dk
    N = B * T

    d_pad = _round_up(D, 128)            # lane-dense contraction axis
    k_pad = _round_up(K, 128)            # MXU-native codebook rows (extras masked)
    fold_esq = d_pad > D                 # spare contraction column for ||e||^2
    mm_bytes = jnp.dtype(matmul_dtype).itemsize

    try:
        vmem_cap = int(pltpu.get_tpu_info().vmem_capacity_bytes)
    except Exception:                    # non-TPU / older runtime: assume v7x budget
        vmem_cap = 64 << 20
    tn, x_bufs, budget = _plan_tiles(N, d_pad, k_pad, mm_bytes, fold_esq, vmem_cap)
    n_pad = _round_up(N, tn)
    num_tiles = n_pad // tn

    # ---- wrapper-side prep: one fused pad/cast pass, no HBM transpose ----------
    flat = latents.reshape(N, D).astype(jnp.float32)
    x_nat = jnp.zeros((n_pad, d_pad), matmul_dtype).at[:N, :D].set(
        flat.astype(matmul_dtype))

    emb = embedding_weight.astype(jnp.float32)
    e_sq = jnp.sum(emb * emb, axis=1)                              # (K,), unscaled
    e_sq_pad = jnp.full((k_pad,), 1e30, jnp.float32).at[:K].set(e_sq)
    # 2x folded into the (cast-once) codebook: MXU emits -2<e, x> directly.
    e_lhs = jnp.zeros((k_pad, d_pad), matmul_dtype).at[:K, :D].set(
        (-2.0 * emb).astype(matmul_dtype))
    if fold_esq:
        # ||e||^2 rides a zero-padded contraction column (x carries 1.0 there),
        # so the matmul emits dist' = ||e||^2 - 2<e, x> at zero extra VPU cost.
        e_lhs = e_lhs.at[:, D].set(e_sq_pad.astype(matmul_dtype))
        x_nat = x_nat.at[:, D].set(1.0)

    compiler_params = pltpu.CompilerParams(
        dimension_semantics=("parallel",),     # independent token tiles (2 TCs on v7x)
        vmem_limit_bytes=int(budget),
    )
    cost = pl.CostEstimate(
        flops=2 * n_pad * k_pad * d_pad,
        transcendentals=0,
        bytes_accessed=(mm_bytes * (n_pad * d_pad + k_pad * d_pad)
                        + 4 * (k_pad + 4 * n_pad)),
    )

    x_kwargs = {} if x_bufs == 2 else {"pipeline_mode": pl.Buffered(x_bufs)}
    x_spec = pl.BlockSpec((tn, d_pad), lambda i: (i, 0), **x_kwargs)
    e_spec = pl.BlockSpec((k_pad, d_pad), lambda i: (0, 0),
                          pipeline_mode=pl.Buffered(1))            # resident, 1 buffer
    esq_spec = pl.BlockSpec((k_pad, 1), lambda i: (0, 0),
                            pipeline_mode=pl.Buffered(1))
    row_spec = pl.BlockSpec((1, tn), lambda i: (0, i))             # lane-dense rows

    if target is None:
        # Inference path: argmin only, no x_sq / loss work at all.
        kernel = functools.partial(_vq_kernel, fold_esq=fold_esq,
                                   has_target=False, inv_d=1.0 / D)
        in_specs = [x_spec, e_spec] + ([] if fold_esq else [esq_spec])
        operands = (x_nat, e_lhs) + (() if fold_esq else (e_sq_pad[:, None],))
        inds = pl.pallas_call(
            kernel,
            out_shape=jax.ShapeDtypeStruct((1, n_pad), jnp.int32),
            grid=(num_tiles,),
            in_specs=in_specs,
            out_specs=row_spec,
            compiler_params=compiler_params,
            cost_estimate=cost,
        )(*operands)
        return inds[:, :N]                       # matches encoding_inds.t()

    # ||x||^2 in f32, computed once in the wrapper (fuses with the pad/cast read).
    x_sq = jnp.zeros((1, n_pad), jnp.float32).at[0, :N].set(
        jnp.sum(flat * flat, axis=1))
    tgt = jnp.zeros((1, n_pad), jnp.int32).at[0, :N].set(
        target.reshape(N).astype(jnp.int32))

    kernel = functools.partial(_vq_kernel, fold_esq=fold_esq,
                               has_target=True, inv_d=1.0 / D)
    in_specs = ([x_spec, e_spec] + ([] if fold_esq else [esq_spec])
                + [row_spec, row_spec])
    operands = ((x_nat, e_lhs) + (() if fold_esq else (e_sq_pad[:, None],))
                + (x_sq, tgt))
    inds, loss = pl.pallas_call(
        kernel,
        out_shape=(jax.ShapeDtypeStruct((1, n_pad), jnp.int32),
                   jax.ShapeDtypeStruct((1, n_pad), jnp.float32)),
        grid=(num_tiles,),
        in_specs=in_specs,
        out_specs=(row_spec, row_spec),
        compiler_params=compiler_params,
        cost_estimate=cost,
    )(*operands)

    encoding_inds = inds[:, :N]                  # (1, B*T), matches encoding_inds.t()
    commitment_loss = loss[0, :N].reshape(B, T)  # mse.mean(-1) over (B, T, D)
    return commitment_loss, encoding_inds


# ------------------------------- reference & checks -----------------------------

def reference_forward(target, latents, embedding_weight):
    """Pure-JAX reference of the PyTorch forward (f32-accurate matmuls)."""
    B, T, D = latents.shape
    K = embedding_weight.shape[0]
    hi = jax.lax.Precision.HIGHEST
    flat = latents.reshape(B * T, D)
    dist = (jnp.sum(flat ** 2, axis=1, keepdims=True)
            + jnp.sum(embedding_weight ** 2, axis=1)
            - 2.0 * jnp.matmul(flat, embedding_weight.T, precision=hi))
    inds = jnp.argmin(dist, axis=1)[None, :]
    if target is None:
        return inds
    one_hot = jax.nn.one_hot(target, K, dtype=jnp.float32)
    q = jnp.matmul(one_hot, embedding_weight, precision=hi).reshape(B, T, D)
    loss = jnp.mean((q - latents) ** 2, axis=-1)
    return loss, inds


def _dist_matrix(latents, emb):
    flat = latents.reshape(-1, latents.shape[-1]).astype(jnp.float32)
    return (jnp.sum(flat ** 2, axis=1, keepdims=True)
            + jnp.sum(emb ** 2, axis=1)
            - 2.0 * jnp.matmul(flat, emb.T, precision=jax.lax.Precision.HIGHEST))


def _check_inds(inds, ref_inds, latents, emb, tol):
    """Chosen codes must be within `tol` squared-distance of the optimum."""
    if bool(jnp.array_equal(inds.astype(jnp.int32), ref_inds.astype(jnp.int32))):
        return
    d = _dist_matrix(latents, emb)
    chosen = jnp.take_along_axis(d, inds.reshape(-1, 1).astype(jnp.int32), axis=1)[:, 0]
    gap = float(jnp.max(chosen - jnp.min(d, axis=1)))
    assert gap <= tol, f"argmin suboptimality {gap} > {tol}"


if __name__ == "__main__":
    key = jax.random.PRNGKey(0)

    # ---- Config 1: D not a multiple of 128 -> ||e||^2 folded into the matmul ----
    B, T, D, K = 2, 8, 32, 16
    k1, k2, k3, key = jax.random.split(key, 4)
    latents = jax.random.normal(k1, (B, T, D), jnp.float32)
    # nn.Embedding(K, D).weight.data.uniform_(-1/K, 1/K)
    emb_w = jax.random.uniform(k2, (K, D), jnp.float32, minval=-1.0 / K, maxval=1.0 / K)
    target = jax.random.randint(k3, (B * T,), 0, K, jnp.int32)

    ref_loss, ref_inds = reference_forward(target, latents, emb_w)

    # Default path: bf16 MXU inputs, f32 accumulation.
    loss, inds = vector_quantizer_forward(target, latents, emb_w)
    jax.block_until_ready((loss, inds))
    assert loss.shape == (B, T) and inds.shape == (1, B * T)
    assert bool(jnp.all(loss >= 0.0))
    assert jnp.allclose(loss, ref_loss, atol=3e-2, rtol=3e-2)
    _check_inds(inds, ref_inds, latents, emb_w, tol=5e-2)

    # f32 MXU inputs: bit-stable argmin, tight loss check.
    loss32, inds32 = vector_quantizer_forward(target, latents, emb_w,
                                              matmul_dtype=jnp.float32)
    jax.block_until_ready((loss32, inds32))
    assert jnp.allclose(loss32, ref_loss, atol=1e-5, rtol=1e-5)
    _check_inds(inds32, ref_inds, latents, emb_w, tol=1e-4)

    # target=None inference path (specialized inds-only kernel, default bf16).
    inds_only = vector_quantizer_forward(None, latents, emb_w)
    jax.block_until_ready(inds_only)
    assert inds_only.shape == (1, B * T)
    _check_inds(inds_only, ref_inds, latents, emb_w, tol=5e-2)

    # ---- Config 2: D a multiple of 128 -> separate ||e||^2 input path -----------
    B2, T2, D2, K2 = 2, 4, 128, 24
    k1, k2, k3, key = jax.random.split(key, 4)
    latents2 = jax.random.normal(k1, (B2, T2, D2), jnp.float32)
    emb_w2 = jax.random.uniform(k2, (K2, D2), jnp.float32,
                                minval=-1.0 / K2, maxval=1.0 / K2)
    target2 = jax.random.randint(k3, (B2 * T2,), 0, K2, jnp.int32)

    ref_loss2, ref_inds2 = reference_forward(target2, latents2, emb_w2)
    loss2, inds2 = vector_quantizer_forward(target2, latents2, emb_w2,
                                            matmul_dtype=jnp.float32)
    jax.block_until_ready((loss2, inds2))
    assert jnp.allclose(loss2, ref_loss2, atol=1e-5, rtol=1e-5)
    _check_inds(inds2, ref_inds2, latents2, emb_w2, tol=1e-4)

    inds2_bf16 = vector_quantizer_forward(None, latents2, emb_w2)
    jax.block_until_ready(inds2_bf16)
    _check_inds(inds2_bf16, ref_inds2, latents2, emb_w2, tol=5e-2)

    print("KERNEL_OK")
</pallas_src>

<mosaic_0001>
module attributes {stable_mosaic.version = 11 : i64} {
  func.func @_vq_kernel(%arg0: i32, %arg1: memref<128x128xbf16, #tpu.memory_space<vmem>>, %arg2: memref<128x128xbf16, #tpu.memory_space<vmem>>, %arg3: memref<1x128xf32, #tpu.memory_space<vmem>>, %arg4: memref<1x128xi32, #tpu.memory_space<vmem>>, %arg5: memref<1x128xi32, #tpu.memory_space<vmem>>, %arg6: memref<1x128xf32, #tpu.memory_space<vmem>>) attributes {dimension_semantics = [#tpu.dimension_semantics<parallel>], iteration_bounds = array<i64: 1>, scalar_prefetch = 0 : i64, scratch_operands = 0 : i64, tpu.core_type = #tpu.core_type<tc>, window_params = [{transform_indices = @transform_0, window_bounds = array<i64: 128, 128>}, {pipeline_mode = #tpu.pipeline_mode<synchronous>, transform_indices = @transform_1, window_bounds = array<i64: 128, 128>}, {transform_indices = @transform_2, window_bounds = array<i64: 1, 128>}, {transform_indices = @transform_3, window_bounds = array<i64: 1, 128>}, {transform_indices = @transform_4, window_bounds = array<i64: 1, 128>}, {transform_indices = @transform_5, window_bounds = array<i64: 1, 128>}]} {
    %c0 = arith.constant 0 : index
    %c0_0 = arith.constant 0 : index
    %0 = vector.load %arg2[%c0, %c0_0] : memref<128x128xbf16, #tpu.memory_space<vmem>>, vector<128x128xbf16>
    %c0_1 = arith.constant 0 : index
    %c0_2 = arith.constant 0 : index
    %1 = vector.load %arg1[%c0_1, %c0_2] : memref<128x128xbf16, #tpu.memory_space<vmem>>, vector<128x128xbf16>
    %cst = arith.constant dense<0.000000e+00> : vector<128x128xf32>
    %2 = tpu.matmul %0, %1, %cst {dimension_numbers = #tpu.dot_dimension_numbers<[1], [1], [0], [0], [0, 0, 1, 0], [], []>} : vector<128x128xbf16>, vector<128x128xbf16>, vector<128x128xf32> -> vector<128x128xf32>
    %3 = tpu.iota {dimensions = array<i32: 0>} : vector<128x1xi32>
    %cst_3 = arith.constant dense<0x7F800000> : vector<128xf32>
    %4 = vector.multi_reduction <minimumf>, %2, %cst_3 [0] : vector<128x128xf32> to vector<128xf32>
    %5 = vector.shape_cast %4 : vector<128xf32> to vector<1x128xf32>
    %6 = vector.broadcast %5 : vector<1x128xf32> to vector<128x128xf32>
    %7 = arith.cmpf oeq, %2, %6 : vector<128x128xf32>
    %c128_i32 = arith.constant 128 : i32
    %8 = vector.shape_cast %3 : vector<128x1xi32> to vector<128x1xi32>
    %9 = vector.broadcast %8 : vector<128x1xi32> to vector<128x128xi32>
    %10 = vector.broadcast %c128_i32 : i32 to vector<128x128xi32>
    %11 = arith.select %7, %9, %10 : vector<128x128xi1>, vector<128x128xi32>
    %cst_4 = arith.constant dense<2147483647> : vector<128xi32>
    %12 = vector.multi_reduction <minsi>, %11, %cst_4 [0] : vector<128x128xi32> to vector<128xi32>
    %13 = vector.shape_cast %12 : vector<128xi32> to vector<1x128xi32>
    %c0_5 = arith.constant 0 : index
    %c0_6 = arith.constant 0 : index
    %14 = vector.load %arg5[%c0_5, %c0_6] : memref<1x128xi32, #tpu.memory_space<vmem>>, vector<1x128xi32>
    tpu.vector_store %arg5[%c0_5, %c0_6], %13 {strides = array<i32>} : memref<1x128xi32, #tpu.memory_space<vmem>>, vector<1x128xi32>,
    %c0_7 = arith.constant 0 : index
    %c0_8 = arith.constant 0 : index
    %15 = vector.load %arg4[%c0_7, %c0_8] : memref<1x128xi32, #tpu.memory_space<vmem>>, vector<1x128xi32>
    %16 = vector.broadcast %3 : vector<128x1xi32> to vector<128x128xi32>
    %17 = vector.broadcast %15 : vector<1x128xi32> to vector<128x128xi32>
    %18 = arith.cmpi eq, %16, %17 : vector<128x128xi32>
    %cst_9 = arith.constant 0.000000e+00 : f32
    %19 = vector.broadcast %cst_9 : f32 to vector<128x128xf32>
    %20 = arith.select %18, %2, %19 : vector<128x128xi1>, vector<128x128xf32>
    %cst_10 = arith.constant dense<0.000000e+00> : vector<128xf32>
    %21 = vector.multi_reduction <add>, %20, %cst_10 [0] : vector<128x128xf32> to vector<128xf32>
    %22 = vector.shape_cast %21 : vector<128xf32> to vector<1x128xf32>
    %c0_11 = arith.constant 0 : index
    %c0_12 = arith.constant 0 : index
    %23 = vector.load %arg3[%c0_11, %c0_12] : memref<1x128xf32, #tpu.memory_space<vmem>>, vector<1x128xf32>
    %24 = arith.addf %22, %23 : vector<1x128xf32>
    %cst_13 = arith.constant 0.000000e+00 : f32
    %25 = vector.broadcast %cst_13 : f32 to vector<1x128xf32>
    %26 = arith.maximumf %24, %25 : vector<1x128xf32>
    %cst_14 = arith.constant 3.125000e-02 : f32
    %27 = vector.broadcast %cst_14 : f32 to vector<1x128xf32>
    %28 = arith.mulf %26, %27 : vector<1x128xf32>
    %c0_15 = arith.constant 0 : index
    %c0_16 = arith.constant 0 : index
    %29 = vector.load %arg6[%c0_15, %c0_16] : memref<1x128xf32, #tpu.memory_space<vmem>>, vector<1x128xf32>
    tpu.vector_store %arg6[%c0_15, %c0_16], %28 {strides = array<i32>} : memref<1x128xf32, #tpu.memory_space<vmem>>, vector<1x128xf32>,
    return
  }
  func.func @transform_0(%arg0: i32) -> (i32, i32) {
    %c0_i32 = arith.constant 0 : i32
    %c0_i32_0 = arith.constant 0 : i32
    return %arg0, %c0_i32 : i32, i32
  }
  func.func @transform_1(%arg0: i32) -> (i32, i32) {
    %c0_i32 = arith.constant 0 : i32
    %c0_i32_0 = arith.constant 0 : i32
    %c0_i32_1 = arith.constant 0 : i32
    return %c0_i32, %c0_i32_0 : i32, i32
  }
  func.func @transform_2(%arg0: i32) -> (i32, i32) {
    %c0_i32 = arith.constant 0 : i32
    %c0_i32_0 = arith.constant 0 : i32
    return %c0_i32, %arg0 : i32, i32
  }
  func.func @transform_3(%arg0: i32) -> (i32, i32) {
    %c0_i32 = arith.constant 0 : i32
    %c0_i32_0 = arith.constant 0 : i32
    return %c0_i32, %arg0 : i32, i32
  }
  func.func @transform_4(%arg0: i32) -> (i32, i32) {
    %c0_i32 = arith.constant 0 : i32
    %c0_i32_0 = arith.constant 0 : i32
    return %c0_i32, %arg0 : i32, i32
  }
  func.func @transform_5(%arg0: i32) -> (i32, i32) {
    %c0_i32 = arith.constant 0 : i32
    %c0_i32_0 = arith.constant 0 : i32
    return %c0_i32, %arg0 : i32, i32
  }
}

</mosaic_0001>

<llo_original>
// kernel: tpu_custom_call.1
$region0: #{tpu_custom_call.1}
  #allocation0 [shape = 'u32[]', space=smem, size = 0x4, offset = 0x4, fixed_abs, tag = 'smem constant byte address 0x4 - core index']
  #allocation1 [shape = 'u32[72,128]{1,0:T(1,128)}', space=vmem, size = 0x9000, scoped, tag = 'internal scratch']
  %s0 = inlined_call_operand.hbm [shape: bf16[128,128], index: 0, kind: input, shape index: {}]
  %s1 = inlined_call_operand.hbm [shape: bf16[128,128], index: 1, kind: input, shape index: {}]
  %s2 = inlined_call_operand.vmem [shape: f32[1,128], index: 2, kind: input, shape index: {}]
  %s3 = inlined_call_operand.vmem [shape: s32[1,128], index: 3, kind: input, shape index: {}]
  %s4 = inlined_call_operand.hbm [shape: s32[1,128], index: 4, kind: output, shape index: {0}]
  %s5 = inlined_call_operand.hbm [shape: f32[1,128], index: 5, kind: output, shape index: {1}]
  %6 = xla_tuple %s4, %s5
  %s7 = sld [smem:[#allocation0]]
  $region42: #{tpu_custom_call.1} parent=0
    _
  %s9 = ssub.s32 1, %s7
  %s10 = scalar_select 0, %s9, %s7
  $region1: #{tpu_custom_call.1} parent=0
    #allocation2 [shape = 'u8[32768]{0}', space=vmem, size = 0x8000, scoped, tag = 'input window, operand 0, single buffered']
    #allocation3 [shape = 's32[1]{0}', space=sflag, size = 0x4, scoped, tag = 'scoped memory for tpu_custom_call.1']
    #allocation4 [shape = 's32[1]{0}', space=sflag, size = 0x4, scoped, tag = 'scoped memory for tpu_custom_call.1']
    #allocation5 [shape = 'u8[32768]{0}', space=vmem, size = 0x8000, scoped, tag = 'input window, operand 1, single buffered']
    #allocation6 [shape = 's32[1]{0}', space=sflag, size = 0x4, scoped, tag = 'scoped memory for tpu_custom_call.1']
    #allocation7 [shape = 'u8[512]{0}', space=vmem, size = 0x400, scoped, tag = 'output window, operand 0, single buffered']
    #allocation8 [shape = 'u8[512]{0}', space=vmem, size = 0x400, scoped, tag = 'output window, operand 1, single buffered']
    #allocation9 [shape = 's32[1]{0}', space=sflag, size = 0x4, scoped, tag = 'scoped memory for tpu_custom_call.1']
    %11 = vsyncpa [#allocation3], 0
    %12 = vsyncpa [#allocation6], 0
    %13 = vsyncpa [#allocation4], 0
    %14 = vsyncpa [#allocation9], 0
    // Predicated region
    $region2: #{tpu_custom_call.1} parent=1 // pred_check
      _
    $region3: #{tpu_custom_call.1} parent=1 // pred_check_branch
      %16 = sbr.rel (0) target = $region5
    $region4: #{tpu_custom_call.1} parent=1 // pred_region
      %18 = vsyncadd [#allocation3], 0
      %s19 = sshll.u32 %s0, 4
      %s20 = int_to_ptr.hbm [resolvable:$true] %s19
      %s21 = sshll.u32 [#allocation2], 4
      %s22 = int_to_ptr.vmem [resolvable:$true] %s21
      %27 = dma.hbm_to_vmem [thread:$0]  %s20, 1024, %s22, [#allocation3], 64, 64, 4
    $region5: #{tpu_custom_call.1} parent=1 // pred_fallthru
      _
    // Predicated region
    $region6: #{tpu_custom_call.1} parent=1 // pred_check
      _
    $region7: #{tpu_custom_call.1} parent=1 // pred_check_branch
      %29 = sbr.rel (0) target = $region9
    $region8: #{tpu_custom_call.1} parent=1 // pred_region
      %31 = vsyncadd [#allocation6], 0
      %s32 = sshll.u32 %s1, 4
      %s33 = int_to_ptr.hbm [resolvable:$true] %s32
      %s34 = sshll.u32 [#allocation5], 4
      %s35 = int_to_ptr.vmem [resolvable:$true] %s34
      %40 = dma.hbm_to_vmem [thread:$0]  %s33, 1024, %s35, [#allocation6], 64, 64, 4
    $region9: #{tpu_custom_call.1} parent=1 // pred_fallthru
      _
    // Predicated region
    $region10: #{tpu_custom_call.1} parent=1 // pred_check
      _
    $region11: #{tpu_custom_call.1} parent=1 // pred_check_branch
      %42 = sbr.rel (0) target = $region13
    $region12: #{tpu_custom_call.1} parent=1 // pred_region
      _
    $region13: #{tpu_custom_call.1} parent=1 // pred_fallthru
      _
    // Predicated region
    $region14: #{tpu_custom_call.1} parent=1 // pred_check
      _
    $region15: #{tpu_custom_call.1} parent=1 // pred_check_branch
      %44 = sbr.rel (0) target = $region17
    $region16: #{tpu_custom_call.1} parent=1 // pred_region
      _
    $region17: #{tpu_custom_call.1} parent=1 // pred_fallthru
      _
    // Predicated region
    $region18: #{tpu_custom_call.1} parent=1 // pred_check
      _
    $region19: #{tpu_custom_call.1} parent=1 // pred_check_branch
      %46 = sbr.rel (0) target = $region21
    $region20: #{tpu_custom_call.1} parent=1 // pred_region
      %48 = dma.done [#allocation3], 1024
    $region21: #{tpu_custom_call.1} parent=1 // pred_fallthru
      _
    // Predicated region
    $region22: #{tpu_custom_call.1} parent=1 // pred_check
      _
    $region23: #{tpu_custom_call.1} parent=1 // pred_check_branch
      %50 = sbr.rel (0) target = $region25
    $region24: #{tpu_custom_call.1} parent=1 // pred_region
      %52 = dma.done [#allocation6], 1024
    $region25: #{tpu_custom_call.1} parent=1 // pred_fallthru
      _
    %v53 = vld [vmem:[#allocation5] sm:$0xf]
    %v54 = vld [vmem:[#allocation5 + $0x4] sm:$0xf]
    %v55 = vld [vmem:[#allocation5 + $0x8] sm:$0xf]
    %v56 = vld [vmem:[#allocation5 + $0xc] sm:$0xf]
    %v57 = vld [vmem:[#allocation5 + $0x10] sm:$0xf]
    %v58 = vld [vmem:[#allocation5 + $0x14] sm:$0xf]
    %v59 = vld [vmem:[#allocation5 + $0x18] sm:$0xf]
    %v60 = vld [vmem:[#allocation5 + $0x1c] sm:$0xf]
    %v61 = vld [vmem:[#allocation5 + $0x20] sm:$0xf]
    %v62 = vld [vmem:[#allocation5 + $0x24] sm:$0xf]
    %v63 = vld [vmem:[#allocation5 + $0x28] sm:$0xf]
    %v64 = vld [vmem:[#allocation5 + $0x2c] sm:$0xf]
    %v65 = vld [vmem:[#allocation5 + $0x30] sm:$0xf]
    %v66 = vld [vmem:[#allocation5 + $0x34] sm:$0xf]
    %v67 = vld [vmem:[#allocation5 + $0x38] sm:$0xf]
    %v68 = vld [vmem:[#allocation5 + $0x3c] sm:$0xf]
    %v69 = vld [vmem:[#allocation2] sm:$0xf]
    %v70 = vld [vmem:[#allocation2 + $0x4] sm:$0xf]
    %v71 = vld [vmem:[#allocation2 + $0x8] sm:$0xf]
    %v72 = vld [vmem:[#allocation2 + $0xc] sm:$0xf]
    %v73 = vld [vmem:[#allocation2 + $0x10] sm:$0xf]
    %v74 = vld [vmem:[#allocation2 + $0x14] sm:$0xf]
    %v75 = vld [vmem:[#allocation2 + $0x18] sm:$0xf]
    %v76 = vld [vmem:[#allocation2 + $0x1c] sm:$0xf]
    %v77 = vld [vmem:[#allocation2 + $0x20] sm:$0xf]
    %v78 = vld [vmem:[#allocation2 + $0x24] sm:$0xf]
    %v79 = vld [vmem:[#allocation2 + $0x28] sm:$0xf]
    %v80 = vld [vmem:[#allocation2 + $0x2c] sm:$0xf]
    %v81 = vld [vmem:[#allocation2 + $0x30] sm:$0xf]
    %v82 = vld [vmem:[#allocation2 + $0x34] sm:$0xf]
    %v83 = vld [vmem:[#allocation2 + $0x38] sm:$0xf]
    %v84 = vld [vmem:[#allocation2 + $0x3c] sm:$0xf]
    %v101 = vunpack.c.l.b16 %v53
    %v102 = vunpack.c.l.b16 %v54
    %v103 = vunpack.c.l.b16 %v55
    %v104 = vunpack.c.l.b16 %v56
    %v105 = vunpack.c.l.b16 %v57
    %v106 = vunpack.c.l.b16 %v58
    %v107 = vunpack.c.l.b16 %v59
    %v108 = vunpack.c.l.b16 %v60
    %v109 = vunpack.c.l.b16 %v61
    %v110 = vunpack.c.l.b16 %v62
    %v111 = vunpack.c.l.b16 %v63
    %v112 = vunpack.c.l.b16 %v64
    %v113 = vunpack.c.l.b16 %v65
    %v114 = vunpack.c.l.b16 %v66
    %v115 = vunpack.c.l.b16 %v67
    %v116 = vunpack.c.l.b16 %v68
    %v117 = vpack.c.b16 %v102, %v101
    %v118 = vpack.c.b16 %v104, %v103
    %v119 = vpack.c.b16 %v106, %v105
    %v120 = vpack.c.b16 %v108, %v107
    %v121 = vpack.c.b16 %v110, %v109
    %v122 = vpack.c.b16 %v112, %v111
    %v123 = vpack.c.b16 %v114, %v113
    %v124 = vpack.c.b16 %v116, %v115
    %v149 = vunpack.c.l.b16 %v69
    %v150 = vunpack.c.l.b16 %v70
    %v151 = vunpack.c.l.b16 %v71
    %v152 = vunpack.c.l.b16 %v72
    %v153 = vunpack.c.l.b16 %v73
    %v154 = vunpack.c.l.b16 %v74
    %v155 = vunpack.c.l.b16 %v75
    %v156 = vunpack.c.l.b16 %v76
    %v157 = vunpack.c.l.b16 %v77
    %v158 = vunpack.c.l.b16 %v78
    %v159 = vunpack.c.l.b16 %v79
    %v160 = vunpack.c.l.b16 %v80
    %v161 = vunpack.c.l.b16 %v81
    %v162 = vunpack.c.l.b16 %v82
    %v163 = vunpack.c.l.b16 %v83
    %v164 = vunpack.c.l.b16 %v84
    %v165 = vpack.c.b16 %v150, %v149
    %v166 = vpack.c.b16 %v152, %v151
    %v167 = vpack.c.b16 %v154, %v153
    %v168 = vpack.c.b16 %v156, %v155
    %v169 = vpack.c.b16 %v158, %v157
    %v170 = vpack.c.b16 %v160, %v159
    %v171 = vpack.c.b16 %v162, %v161
    %v172 = vpack.c.b16 %v164, %v163
    %181 = vmatpush.bf16.xpose.msra.mxu0 %v172
    %182 = vmatpush.bf16.xpose.msra.mxu0 %v171
    %183 = vmatpush.bf16.xpose.msra.mxu0 %v170
    %184 = vmatpush.bf16.xpose.msra.mxu0 %v169
    %185 = vmatpush.bf16.xpose.msra.mxu0 %v168
    %186 = vmatpush.bf16.xpose.msra.mxu0 %v167
    %187 = vmatpush.bf16.xpose.msra.mxu0 %v166
    %188 = vmatpush.bf16.xpose.msra.mxu0 %v165
    %189 = vmatmul.bf16.gmra.mxu0 %v117
    %v190 = vpop.f32.mrf.mxu0
    %v191 = vadd.f32 0.0, %v190
    %v192 = vpop.f32.mrf.mxu0
    %v193 = vadd.f32 0.0, %v192
    %194 = vmatmul.bf16.gmra.mxu0 %v118
    %v195 = vpop.f32.mrf.mxu0
    %v196 = vadd.f32 0.0, %v195
    %v197 = vpop.f32.mrf.mxu0
    %v198 = vadd.f32 0.0, %v197
    %199 = vmatmul.bf16.gmra.mxu0 %v119
    %v200 = vpop.f32.mrf.mxu0
    %v201 = vadd.f32 0.0, %v200
    %v202 = vpop.f32.mrf.mxu0
    %v203 = vadd.f32 0.0, %v202
    %204 = vmatmul.bf16.gmra.mxu0 %v120
    %v205 = vpop.f32.mrf.mxu0
    %v206 = vadd.f32 0.0, %v205
    %v207 = vpop.f32.mrf.mxu0
    %v208 = vadd.f32 0.0, %v207
    %209 = vmatmul.bf16.gmra.mxu0 %v121
    %v210 = vpop.f32.mrf.mxu0
    %v211 = vadd.f32 0.0, %v210
    %v212 = vpop.f32.mrf.mxu0
    %v213 = vadd.f32 0.0, %v212
    %214 = vmatmul.bf16.gmra.mxu0 %v122
    %v215 = vpop.f32.mrf.mxu0
    %v216 = vadd.f32 0.0, %v215
    %v217 = vpop.f32.mrf.mxu0
    %v218 = vadd.f32 0.0, %v217
    %219 = vmatmul.bf16.gmra.mxu0 %v123
    %v220 = vpop.f32.mrf.mxu0
    %v221 = vadd.f32 0.0, %v220
    %v222 = vpop.f32.mrf.mxu0
    %v223 = vadd.f32 0.0, %v222
    %224 = vmatmul.bf16.gmra.mxu0 %v124
    %v225 = vpop.f32.mrf.mxu0
    %v226 = vadd.f32 0.0, %v225
    %v227 = vpop.f32.mrf.mxu0
    %v228 = vadd.f32 0.0, %v227
    %229 = vdwg.mxu0
    %v230 = vlaneseq
    %v231 = vshrl.u32 %v230, 7
    %v232 = vadd.s32 %v231, 8
    %v233 = vadd.s32 %v231, 16
    %v234 = vadd.s32 %v231, 24
    %v235 = vadd.s32 %v231, 32
    %v236 = vadd.s32 %v231, 40
    %v237 = vadd.s32 %v231, 48
    %v238 = vadd.s32 %v231, 56
    %v239 = vadd.s32 %v231, 64
    %v240 = vadd.s32 %v231, 72
    %v241 = vadd.s32 %v231, 80
    %v242 = vadd.s32 %v231, 88
    %v243 = vadd.s32 %v231, 96
    %v244 = vadd.s32 %v231, 104
    %v245 = vadd.s32 %v231, 112
    %v246 = vadd.s32 %v231, 120
    %v247 = vmin.f32 %v191, %v201
    %v248 = vmin.f32 %v193, %v203
    %v249 = vmin.f32 %v196, %v206
    %v250 = vmin.f32 %v198, %v208
    %v251 = vmin.f32 %v247, %v211
    %v252 = vmin.f32 %v248, %v213
    %v253 = vmin.f32 %v249, %v216
    %v254 = vmin.f32 %v250, %v218
    %v255 = vmin.f32 %v251, %v221
    %v256 = vmin.f32 %v252, %v223
    %v257 = vmin.f32 %v253, %v226
    %v258 = vmin.f32 %v254, %v228
    %v259 = vmin.f32 %v255, %v256
    %v260 = vmin.f32 %v257, %v258
    %v261 = vmin.f32 %v259, %v260
    %v262 = vrot.slane %v261, 4
    %v263 = vmin.f32 %v261, %v262
    %v264 = vrot.slane %v263, 2
    %v265 = vmin.f32 %v263, %v264
    %v266 = vrot.slane %v265, 1
    %v267 = vmin.f32 %v265, %v266
    %vm268 = vcmp.eq.f32.partialorder %v191, %v267
    %vm269 = vcmp.eq.f32.partialorder %v193, %v267
    %vm270 = vcmp.eq.f32.partialorder %v196, %v267
    %vm271 = vcmp.eq.f32.partialorder %v198, %v267
    %vm272 = vcmp.eq.f32.partialorder %v201, %v267
    %vm273 = vcmp.eq.f32.partialorder %v203, %v267
    %vm274 = vcmp.eq.f32.partialorder %v206, %v267
    %vm275 = vcmp.eq.f32.partialorder %v208, %v267
    %vm276 = vcmp.eq.f32.partialorder %v211, %v267
    %vm277 = vcmp.eq.f32.partialorder %v213, %v267
    %vm278 = vcmp.eq.f32.partialorder %v216, %v267
    %vm279 = vcmp.eq.f32.partialorder %v218, %v267
    %vm280 = vcmp.eq.f32.partialorder %v221, %v267
    %vm281 = vcmp.eq.f32.partialorder %v223, %v267
    %vm282 = vcmp.eq.f32.partialorder %v226, %v267
    %vm283 = vcmp.eq.f32.partialorder %v228, %v267
    %v284 = vsel %vm268, %v231, 128
    %v285 = vsel %vm269, %v232, 128
    %v286 = vsel %vm270, %v233, 128
    %v287 = vsel %vm271, %v234, 128
    %v288 = vsel %vm272, %v235, 128
    %v289 = vsel %vm273, %v236, 128
    %v290 = vsel %vm274, %v237, 128
    %v291 = vsel %vm275, %v238, 128
    %v292 = vsel %vm276, %v239, 128
    %v293 = vsel %vm277, %v240, 128
    %v294 = vsel %vm278, %v241, 128
    %v295 = vsel %vm279, %v242, 128
    %v296 = vsel %vm280, %v243, 128
    %v297 = vsel %vm281, %v244, 128
    %v298 = vsel %vm282, %v245, 128
    %v299 = vsel %vm283, %v246, 128
    %vm300 = vcmp.lt.s32.totalorder %v284, %v288
    %v301 = vsel %vm300, %v284, %v288
    %vm302 = vcmp.lt.s32.totalorder %v285, %v289
    %v303 = vsel %vm302, %v285, %v289
    %vm304 = vcmp.lt.s32.totalorder %v286, %v290
    %v305 = vsel %vm304, %v286, %v290
    %vm306 = vcmp.lt.s32.totalorder %v287, %v291
    %v307 = vsel %vm306, %v287, %v291
    %vm308 = vcmp.lt.s32.totalorder %v301, %v292
    %v309 = vsel %vm308, %v301, %v292
    %vm310 = vcmp.lt.s32.totalorder %v303, %v293
    %v311 = vsel %vm310, %v303, %v293
    %vm312 = vcmp.lt.s32.totalorder %v305, %v294
    %v313 = vsel %vm312, %v305, %v294
    %vm314 = vcmp.lt.s32.totalorder %v307, %v295
    %v315 = vsel %vm314, %v307, %v295
    %vm316 = vcmp.lt.s32.totalorder %v309, %v296
    %v317 = vsel %vm316, %v309, %v296
    %vm318 = vcmp.lt.s32.totalorder %v311, %v297
    %v319 = vsel %vm318, %v311, %v297
    %vm320 = vcmp.lt.s32.totalorder %v313, %v298
    %v321 = vsel %vm320, %v313, %v298
    %vm322 = vcmp.lt.s32.totalorder %v315, %v299
    %v323 = vsel %vm322, %v315, %v299
    %vm324 = vcmp.lt.s32.totalorder %v317, %v319
    %v325 = vsel %vm324, %v317, %v319
    %vm326 = vcmp.lt.s32.totalorder %v321, %v323
    %v327 = vsel %vm326, %v321, %v323
    %vm328 = vcmp.lt.s32.totalorder %v325, %v327
    %v329 = vsel %vm328, %v325, %v327
    %v330 = vrot.slane %v329, 4
    %vm331 = vcmp.lt.s32.totalorder %v329, %v330
    %v332 = vsel %vm331, %v329, %v330
    %v333 = vrot.slane %v332, 2
    %vm334 = vcmp.lt.s32.totalorder %v332, %v333
    %v335 = vsel %vm334, %v332, %v333
    %v336 = vrot.slane %v335, 1
    %vm337 = vcmp.lt.s32.totalorder %v335, %v336
    %v338 = vsel %vm337, %v335, %v336
    %339 = vst [vmem:[#allocation7] sm:$0x1] %v338
    %v340 = vld [vmem:[%s3] sm:$0x1]
    %v341 = vperm.slane %v340, 0
    %vm342 = vcmp.eq.s32.totalorder %v231, %v341
    %vm343 = vcmp.eq.s32.totalorder %v232, %v341
    %vm344 = vcmp.eq.s32.totalorder %v233, %v341
    %vm345 = vcmp.eq.s32.totalorder %v234, %v341
    %vm346 = vcmp.eq.s32.totalorder %v235, %v341
    %vm347 = vcmp.eq.s32.totalorder %v236, %v341
    %vm348 = vcmp.eq.s32.totalorder %v237, %v341
    %vm349 = vcmp.eq.s32.totalorder %v238, %v341
    %vm350 = vcmp.eq.s32.totalorder %v239, %v341
    %vm351 = vcmp.eq.s32.totalorder %v240, %v341
    %vm352 = vcmp.eq.s32.totalorder %v241, %v341
    %vm353 = vcmp.eq.s32.totalorder %v242, %v341
    %vm354 = vcmp.eq.s32.totalorder %v243, %v341
    %vm355 = vcmp.eq.s32.totalorder %v244, %v341
    %vm356 = vcmp.eq.s32.totalorder %v245, %v341
    %vm357 = vcmp.eq.s32.totalorder %v246, %v341
    %v358 = vsel %vm342, %v191, 0.0
    %v359 = vsel %vm343, %v193, 0.0
    %v360 = vsel %vm344, %v196, 0.0
    %v361 = vsel %vm345, %v198, 0.0
    %v362 = vsel %vm346, %v201, 0.0
    %v363 = vsel %vm347, %v203, 0.0
    %v364 = vsel %vm348, %v206, 0.0
    %v365 = vsel %vm349, %v208, 0.0
    %v366 = vsel %vm350, %v211, 0.0
    %v367 = vsel %vm351, %v213, 0.0
    %v368 = vsel %vm352, %v216, 0.0
    %v369 = vsel %vm353, %v218, 0.0
    %v370 = vsel %vm354, %v221, 0.0
    %v371 = vsel %vm355, %v223, 0.0
    %v372 = vsel %vm356, %v226, 0.0
    %v373 = vsel %vm357, %v228, 0.0
    %v374 = vadd.f32 %v358, %v359
    %v375 = vadd.f32 %v374, %v360
    %v376 = vadd.f32 %v375, %v361
    %v377 = vadd.f32 %v376, %v362
    %v378 = vadd.f32 %v377, %v363
    %v379 = vadd.f32 %v378, %v364
    %v380 = vadd.f32 %v379, %v365
    %v381 = vadd.f32 %v380, %v366
    %v382 = vadd.f32 %v381, %v367
    %v383 = vadd.f32 %v382, %v368
    %v384 = vadd.f32 %v383, %v369
    %v385 = vadd.f32 %v384, %v370
    %v386 = vadd.f32 %v385, %v371
    %v387 = vadd.f32 %v386, %v372
    %v388 = vadd.f32 %v387, %v373
    %v389 = vrot.slane %v388, 4
    %v390 = vadd.f32 %v388, %v389
    %v391 = vrot.slane %v390, 2
    %v392 = vadd.f32 %v390, %v391
    %v393 = vrot.slane %v392, 1
    %v394 = vadd.f32 %v392, %v393
    %v395 = vld [vmem:[%s2] sm:$0x1]
    %v396 = vadd.f32 %v394, %v395
    %v397 = vmax.f32 %v396, 0.0
    %v398 = vmul.f32 %v397, 0.03125
    %399 = vst [vmem:[#allocation8] sm:$0x1] %v398
    // Predicated region
    $region26: #{tpu_custom_call.1} parent=1 // pred_check
      _
    $region27: #{tpu_custom_call.1} parent=1 // pred_check_branch
      %401 = sbr.rel (0) target = $region29
    $region28: #{tpu_custom_call.1} parent=1 // pred_region
      %403 = vsyncadd [#allocation4], 0
      %s405 = sshll.u32 [#allocation7], 4
      %s406 = int_to_ptr.vmem [resolvable:$true] %s405
      %s407 = sshll.u32 %s4, 4
      %s408 = int_to_ptr.hbm [resolvable:$true] %s407
      %410 = dma.vmem_to_hbm [thread:$0]  %s406, 16, %s408, [#allocation4]
    $region29: #{tpu_custom_call.1} parent=1 // pred_fallthru
      _
    // Predicated region
    $region30: #{tpu_custom_call.1} parent=1 // pred_check
      _
    $region31: #{tpu_custom_call.1} parent=1 // pred_check_branch
      %412 = sbr.rel (0) target = $region33
    $region32: #{tpu_custom_call.1} parent=1 // pred_region
      %414 = vsyncadd [#allocation9], 0
      %s416 = sshll.u32 [#allocation8], 4
      %s417 = int_to_ptr.vmem [resolvable:$true] %s416
      %s418 = sshll.u32 %s5, 4
      %s419 = int_to_ptr.hbm [resolvable:$true] %s418
      %421 = dma.vmem_to_hbm [thread:$0]  %s417, 16, %s419, [#allocation9]
    $region33: #{tpu_custom_call.1} parent=1 // pred_fallthru
      _
    // Predicated region
    $region34: #{tpu_custom_call.1} parent=1 // pred_check
      _
    $region35: #{tpu_custom_call.1} parent=1 // pred_check_branch
      %423 = sbr.rel (0) target = $region37
    $region36: #{tpu_custom_call.1} parent=1 // pred_region
      %425 = dma.done [#allocation4], 16
    $region37: #{tpu_custom_call.1} parent=1 // pred_fallthru
      _
    // Predicated region
    $region38: #{tpu_custom_call.1} parent=1 // pred_check
      _
    $region39: #{tpu_custom_call.1} parent=1 // pred_check_branch
      %427 = sbr.rel (0) target = $region41
    $region40: #{tpu_custom_call.1} parent=1 // pred_region
      %429 = dma.done [#allocation9], 16
    $region41: #{tpu_custom_call.1} parent=1 // pred_fallthru
      _
    %430 = vsyncpa [#allocation3], 1
    %431 = vsyncpa [#allocation6], 1
    %432 = vsyncpa [#allocation4], 1
    %433 = vsyncpa [#allocation9], 1

</llo_original>
